<compile_context>
chip_gen: v7x
topology: tpu7x:2x2x1
jax: 0.10.0
libtpu: 0.0.40
codegen_flags: <defaults>
</compile_context>

<pallas_src>
import jax
import jax.numpy as jnp
from jax import lax
from jax.experimental import pallas as pl
from jax.experimental.pallas import tpu as pltpu

# Problem sizes (small, consistent with the module: Cin=3 -> Cout=6 -> 2)
N, CIN, H, W = 2, 3, 16, 16
COUT1, COUT2 = 6, 2
KH, KW = 3, 3
K = CIN * KH * KW          # 27 folded taps per output channel
K_PAD = 32                 # 27 taps + 1 bias row + 4 zero rows -> (8,128)-tile exact
NHW = N * H * W            # 512 pixels -> lane-dense last dim (4 * 128 lanes)


def fused_conv_kernel(w_ref, patches_ref, out_ref):
    """Fused (Conv2d(3,6,3,p=1) ∘ Linear(6,2)) as one MXU matmul.

    w_ref:       (COUT2, K_PAD)  VMEM -- [folded taps | bias | zeros]
    patches_ref: (K_PAD, NHW)    VMEM -- im2col rows (k = ci*9+ky*3+kx),
                                         row K is all-ones (bias), rest zeros.
    out_ref:     (COUT2, NHW)    VMEM
    """
    out_ref[...] = jnp.dot(w_ref[...], patches_ref[...],
                           preferred_element_type=jnp.float32)


@jax.jit
def model_forward(x, w_conv, b_conv, w_lin, b_lin):
    """x: (N, CIN, H, W) f32  ->  (N, COUT2, H, W) f32"""
    x = x.astype(jnp.float32)
    w_conv = w_conv.astype(jnp.float32)
    b_conv = b_conv.astype(jnp.float32)
    w_lin = w_lin.astype(jnp.float32)
    b_lin = b_lin.astype(jnp.float32)

    # ---- Fold Linear(6,2) into the conv weights (pure weight-prep algebra):
    #   w_eff[o,ci,ky,kx] = sum_co w_lin[o,co] * w_conv[co,ci,ky,kx]
    #   b_eff[o]          = b_lin[o] + sum_co w_lin[o,co] * b_conv[co]
    w_eff = jnp.einsum("oc,cijk->oijk", w_lin, w_conv)   # (COUT2, CIN, KH, KW)
    b_eff = b_lin + w_lin @ b_conv                       # (COUT2,)

    # Packed (COUT2, K_PAD) weight matrix: taps | bias column | zero pad.
    w_mat = jnp.concatenate(
        [w_eff.reshape(COUT2, K),
         b_eff[:, None],
         jnp.zeros((COUT2, K_PAD - K - 1), jnp.float32)], axis=1)

    # ---- im2col-lite: transpose the small input to channel-major once, then
    # stack the 9 (pad=1) shifts and reshape straight to (K, NHW).  The big
    # patches slab is never transposed.
    x_cm = x.transpose(1, 0, 2, 3)                            # (CIN, N, H, W)
    x_pad = jnp.pad(x_cm, ((0, 0), (0, 0), (1, 1), (1, 1)))
    shifts = [x_pad[:, :, ky:ky + H, kx:kx + W]
              for ky in range(KH) for kx in range(KW)]        # each (CIN, N, H, W)
    patches = jnp.stack(shifts, axis=1).reshape(K, NHW)       # k = ci*9+ky*3+kx
    patches = jnp.concatenate(
        [patches,
         jnp.ones((1, NHW), jnp.float32),                      # bias row
         jnp.zeros((K_PAD - K - 1, NHW), jnp.float32)], axis=0)  # (K_PAD, NHW)

    out_flat = pl.pallas_call(
        fused_conv_kernel,
        out_shape=jax.ShapeDtypeStruct((COUT2, NHW), jnp.float32),
        in_specs=[
            pl.BlockSpec(memory_space=pltpu.MemorySpace.VMEM),
            pl.BlockSpec(memory_space=pltpu.MemorySpace.VMEM),
        ],
        out_specs=pl.BlockSpec(memory_space=pltpu.MemorySpace.VMEM),
    )(w_mat, patches)

    # Back to NCHW (fused by XLA inside the jit).
    return out_flat.reshape(COUT2, N, H, W).transpose(1, 0, 2, 3)


def reference_forward(x, w_conv, b_conv, w_lin, b_lin):
    """Plain-JAX reference (lax conv + channel-wise linear)."""
    v1 = lax.conv_general_dilated(
        x, w_conv, window_strides=(1, 1), padding=((1, 1), (1, 1)),
        dimension_numbers=("NCHW", "OIHW", "NCHW"))
    v1 = v1 + b_conv[None, :, None, None]
    v2 = jnp.einsum("nchw,oc->nohw", v1, w_lin) + b_lin[None, :, None, None]
    return v2


if __name__ == "__main__":
    key = jax.random.PRNGKey(0)
    kx, kwc, kbc, kwl, kbl = jax.random.split(key, 5)

    x = jax.random.normal(kx, (N, CIN, H, W), dtype=jnp.float32)

    # Deterministic parameter init (uniform, roughly PyTorch-style fan-in scale).
    fan_conv = CIN * KH * KW
    w_conv = jax.random.uniform(kwc, (COUT1, CIN, KH, KW), jnp.float32,
                                -1.0 / jnp.sqrt(fan_conv), 1.0 / jnp.sqrt(fan_conv))
    b_conv = jax.random.uniform(kbc, (COUT1,), jnp.float32,
                                -1.0 / jnp.sqrt(fan_conv), 1.0 / jnp.sqrt(fan_conv))
    w_lin = jax.random.uniform(kwl, (COUT2, COUT1), jnp.float32,
                               -1.0 / jnp.sqrt(COUT1), 1.0 / jnp.sqrt(COUT1))
    b_lin = jax.random.uniform(kbl, (COUT2,), jnp.float32,
                               -1.0 / jnp.sqrt(COUT1), 1.0 / jnp.sqrt(COUT1))

    out = model_forward(x, w_conv, b_conv, w_lin, b_lin)
    out = jax.block_until_ready(out)

    ref = reference_forward(x, w_conv, b_conv, w_lin, b_lin)
    assert out.shape == (N, COUT2, H, W)
    assert jnp.allclose(out, ref, atol=1e-4, rtol=1e-3), "mismatch vs reference"

    print("KERNEL_OK")
</pallas_src>

<mosaic_0001>
module attributes {stable_mosaic.version = 11 : i64} {
  func.func @fused_conv_kernel(%arg0: memref<2x32xf32, #tpu.memory_space<vmem>>, %arg1: memref<32x512xf32, #tpu.memory_space<vmem>>, %arg2: memref<2x512xf32, #tpu.memory_space<vmem>>) attributes {dimension_semantics = [], scalar_prefetch = 0 : i64, scratch_operands = 0 : i64, tpu.core_type = #tpu.core_type<tc>} {
    %c0 = arith.constant 0 : index
    %c0_0 = arith.constant 0 : index
    %0 = vector.load %arg0[%c0, %c0_0] : memref<2x32xf32, #tpu.memory_space<vmem>>, vector<2x32xf32>
    %c0_1 = arith.constant 0 : index
    %c0_2 = arith.constant 0 : index
    %1 = vector.load %arg1[%c0_1, %c0_2] : memref<32x512xf32, #tpu.memory_space<vmem>>, vector<32x512xf32>
    %cst = arith.constant dense<0.000000e+00> : vector<2x512xf32>
    %2 = tpu.matmul %0, %1, %cst {dimension_numbers = #tpu.dot_dimension_numbers<[1], [0], [0], [1], [0, 0, 1, 1], [], []>} : vector<2x32xf32>, vector<32x512xf32>, vector<2x512xf32> -> vector<2x512xf32>
    %c0_3 = arith.constant 0 : index
    %c0_4 = arith.constant 0 : index
    %3 = vector.load %arg2[%c0_3, %c0_4] : memref<2x512xf32, #tpu.memory_space<vmem>>, vector<2x512xf32>
    tpu.vector_store %arg2[%c0_3, %c0_4], %2 {strides = array<i32>} : memref<2x512xf32, #tpu.memory_space<vmem>>, vector<2x512xf32>,
    return
  }
}

</mosaic_0001>

<llo_original>
// kernel: model_forward.1
$region0: #{model_forward.1}
  #allocation0 [shape = 'u32[]', space=smem, size = 0x4, offset = 0x4, fixed_abs, tag = 'smem constant byte address 0x4 - core index']
  #allocation1 [shape = 'u32[144,128]{1,0:T(1,128)}', space=vmem, size = 0x12000, scoped, tag = 'internal scratch']
  %s0 = inlined_call_operand.vmem [shape: f32[2,32], index: 0, kind: input, shape index: {}]
  %s1 = inlined_call_operand.vmem [shape: f32[32,512], index: 1, kind: input, shape index: {}]
  %s2 = inlined_call_operand.vmem [shape: f32[2,512], index: 2, kind: output, shape index: {}]
  %s3 = sld [smem:[#allocation0]]
  $region18: #{model_forward.1} parent=0
    _
  %s5 = ssub.s32 1, %s3
  %s6 = scalar_select 0, %s5, %s3
  // Predicated region
  $region2: #{model_forward.1} parent=0 // pred_check
    _
  $region3: #{model_forward.1} parent=0 // pred_check_branch
    %8 = sbr.rel (0) target = $region5
  $region4: #{model_forward.1} parent=0 // pred_region
    _
  $region5: #{model_forward.1} parent=0 // pred_fallthru
    _
  // Predicated region
  $region6: #{model_forward.1} parent=0 // pred_check
    _
  $region7: #{model_forward.1} parent=0 // pred_check_branch
    %10 = sbr.rel (0) target = $region9
  $region8: #{model_forward.1} parent=0 // pred_region
    _
  $region9: #{model_forward.1} parent=0 // pred_fallthru
    _
  %v11 = vld [vmem:[%s0] sm:$0x3]
  %v12 = vld [vmem:[%s1] sm:$0xff]
  %v13 = vld [vmem:[%s1 + $0x8] sm:$0xff]
  %v14 = vld [vmem:[%s1 + $0x10] sm:$0xff]
  %v15 = vld [vmem:[%s1 + $0x18] sm:$0xff]
  %v16 = vld [vmem:[%s1 + $0x20] sm:$0xff]
  %v17 = vld [vmem:[%s1 + $0x28] sm:$0xff]
  %v18 = vld [vmem:[%s1 + $0x30] sm:$0xff]
  %v19 = vld [vmem:[%s1 + $0x38] sm:$0xff]
  %v20 = vld [vmem:[%s1 + $0x40] sm:$0xff]
  %v21 = vld [vmem:[%s1 + $0x48] sm:$0xff]
  %v22 = vld [vmem:[%s1 + $0x50] sm:$0xff]
  %v23 = vld [vmem:[%s1 + $0x58] sm:$0xff]
  %v24 = vld [vmem:[%s1 + $0x60] sm:$0xff]
  %v25 = vld [vmem:[%s1 + $0x68] sm:$0xff]
  %v26 = vld [vmem:[%s1 + $0x70] sm:$0xff]
  %v27 = vld [vmem:[%s1 + $0x78] sm:$0xff]
  %vm28 = vcmask 261120
  %v30 = vsel %vm28, %v11, 0
  %32 = vmatprep.subr.mxu0 %v13
  %33 = vmatpush1.msra.mxu0 %v12
  %34 = vmatprep.subr.mxu0 %v17
  %35 = vmatpush1.msra.mxu0 %v16
  %36 = vmatprep.subr.mxu0 %v21
  %37 = vmatpush1.msra.mxu0 %v20
  %38 = vmatprep.subr.mxu0 %v25
  %39 = vmatpush1.msra.mxu0 %v24
  %40 = vmatprep.subr.mxu0 0.0
  %41 = vmatpush1.msra.mxu0 0.0
  %42 = vmatprep.subr.mxu0 0.0
  %43 = vmatpush1.msra.mxu0 0.0
  %44 = vmatprep.subr.mxu0 0.0
  %45 = vmatpush1.msra.mxu0 0.0
  %46 = vmatprep.subr.mxu0 0.0
  %47 = vmatpush1.msra.mxu0 0.0
  %48 = vmatprep.subr.mxu0 0.0
  %49 = vmatpush1.msra.mxu0 0.0
  %50 = vmatprep.subr.mxu0 0.0
  %51 = vmatpush1.msra.mxu0 0.0
  %52 = vmatprep.subr.mxu0 0.0
  %53 = vmatpush1.msra.mxu0 0.0
  %54 = vmatprep.subr.mxu0 0.0
  %55 = vmatpush1.msra.mxu0 0.0
  %56 = vmatprep.subr.mxu0 0.0
  %57 = vmatpush1.msra.mxu0 0.0
  %58 = vmatprep.subr.mxu0 0.0
  %59 = vmatpush1.msra.mxu0 0.0
  %60 = vmatprep.subr.mxu0 0.0
  %61 = vmatpush1.msra.mxu0 0.0
  %62 = vmatprep.subr.mxu0 0.0
  %63 = vmatpush1.msra.mxu0 0.0
  %64 = vmatprep.subr.mxu0 0.0
  %65 = vmatpush1.msra.mxu0 0.0
  %66 = vmatprep.subr.mxu0 0.0
  %67 = vmatpush1.msra.mxu0 0.0
  %68 = vmatprep.subr.mxu0 0.0
  %69 = vmatpush1.msra.mxu0 0.0
  %70 = vmatprep.subr.mxu0 0.0
  %71 = vmatpush1.msra.mxu0 0.0
  %72 = vmatprep.subr.mxu0 0.0
  %73 = vmatpush1.msra.mxu0 0.0
  %74 = vmatprep.subr.mxu0 0.0
  %75 = vmatpush1.msra.mxu0 0.0
  %76 = vmatprep.subr.mxu0 0.0
  %77 = vmatpush1.msra.mxu0 0.0
  %78 = vmatprep.subr.mxu0 0.0
  %79 = vmatpush1.msra.mxu0 0.0
  %80 = vmatprep.subr.mxu0 0.0
  %81 = vmatpush1.msra.mxu0 0.0
  %82 = vmatprep.subr.mxu0 0.0
  %83 = vmatpush1.msra.mxu0 0.0
  %84 = vmatprep.subr.mxu0 0.0
  %85 = vmatpush1.msra.mxu0 0.0
  %86 = vmatprep.subr.mxu0 0.0
  %87 = vmatpush1.msra.mxu0 0.0
  %88 = vmatprep.subr.mxu0 0.0
  %89 = vmatpush1.msra.mxu0 0.0
  %90 = vmatprep.subr.mxu0 0.0
  %91 = vmatpush1.msra.mxu0 0.0
  %92 = vmatprep.subr.mxu0 0.0
  %93 = vmatpush1.msra.mxu0 0.0
  %94 = vmatprep.subr.mxu0 0.0
  %95 = vmatpush1.msra.mxu0 0.0
  %96 = vmatprep.mubr.f32.mxu0 0.0
  %97 = vmatmul.mubr.f32.gmra.mrb[0].mxu0 %v30
  %v98 = vpop.f32.mrb[0].mxu0
  %v99 = vadd.f32 0.0, %v98
  %v100 = vpop.f32.mrb[0].mxu0
  %v101 = vadd.f32 0.0, %v100
  %102 = vdwg.mxu0
  %103 = vmatprep.subr.mxu0 %v15
  %104 = vmatpush1.msra.mxu0 %v14
  %105 = vmatprep.subr.mxu0 %v19
  %106 = vmatpush1.msra.mxu0 %v18
  %107 = vmatprep.subr.mxu0 %v23
  %108 = vmatpush1.msra.mxu0 %v22
  %109 = vmatprep.subr.mxu0 %v27
  %110 = vmatpush1.msra.mxu0 %v26
  %111 = vmatprep.subr.mxu0 0.0
  %112 = vmatpush1.msra.mxu0 0.0
  %113 = vmatprep.subr.mxu0 0.0
  %114 = vmatpush1.msra.mxu0 0.0
  %115 = vmatprep.subr.mxu0 0.0
  %116 = vmatpush1.msra.mxu0 0.0
  %117 = vmatprep.subr.mxu0 0.0
  %118 = vmatpush1.msra.mxu0 0.0
  %119 = vmatprep.subr.mxu0 0.0
  %120 = vmatpush1.msra.mxu0 0.0
  %121 = vmatprep.subr.mxu0 0.0
  %122 = vmatpush1.msra.mxu0 0.0
  %123 = vmatprep.subr.mxu0 0.0
  %124 = vmatpush1.msra.mxu0 0.0
  %125 = vmatprep.subr.mxu0 0.0
  %126 = vmatpush1.msra.mxu0 0.0
  %127 = vmatprep.subr.mxu0 0.0
  %128 = vmatpush1.msra.mxu0 0.0
  %129 = vmatprep.subr.mxu0 0.0
  %130 = vmatpush1.msra.mxu0 0.0
  %131 = vmatprep.subr.mxu0 0.0
  %132 = vmatpush1.msra.mxu0 0.0
  %133 = vmatprep.subr.mxu0 0.0
  %134 = vmatpush1.msra.mxu0 0.0
  %135 = vmatprep.subr.mxu0 0.0
  %136 = vmatpush1.msra.mxu0 0.0
  %137 = vmatprep.subr.mxu0 0.0
  %138 = vmatpush1.msra.mxu0 0.0
  %139 = vmatprep.subr.mxu0 0.0
  %140 = vmatpush1.msra.mxu0 0.0
  %141 = vmatprep.subr.mxu0 0.0
  %142 = vmatpush1.msra.mxu0 0.0
  %143 = vmatprep.subr.mxu0 0.0
  %144 = vmatpush1.msra.mxu0 0.0
  %145 = vmatprep.subr.mxu0 0.0
  %146 = vmatpush1.msra.mxu0 0.0
  %147 = vmatprep.subr.mxu0 0.0
  %148 = vmatpush1.msra.mxu0 0.0
  %149 = vmatprep.subr.mxu0 0.0
  %150 = vmatpush1.msra.mxu0 0.0
  %151 = vmatprep.subr.mxu0 0.0
  %152 = vmatpush1.msra.mxu0 0.0
  %153 = vmatprep.subr.mxu0 0.0
  %154 = vmatpush1.msra.mxu0 0.0
  %155 = vmatprep.subr.mxu0 0.0
  %156 = vmatpush1.msra.mxu0 0.0
  %157 = vmatprep.subr.mxu0 0.0
  %158 = vmatpush1.msra.mxu0 0.0
  %159 = vmatprep.subr.mxu0 0.0
  %160 = vmatpush1.msra.mxu0 0.0
  %161 = vmatprep.subr.mxu0 0.0
  %162 = vmatpush1.msra.mxu0 0.0
  %163 = vmatprep.subr.mxu0 0.0
  %164 = vmatpush1.msra.mxu0 0.0
  %165 = vmatprep.subr.mxu0 0.0
  %166 = vmatpush1.msra.mxu0 0.0
  %167 = vmatprep.mubr.f32.mxu0 0.0
  %168 = vmatmul.mubr.f32.gmra.mrb[0].mxu0 %v30
  %v169 = vpop.f32.mrb[0].mxu0
  %v170 = vadd.f32 0.0, %v169
  %v171 = vpop.f32.mrb[0].mxu0
  %v172 = vadd.f32 0.0, %v171
  %173 = vdwg.mxu0
  %v178 = vcombine.low %v99, %v101
  %v179 = vcombine.low %v170, %v172
  %v181 = vunpack.c.l.s4 1983009808
  %v182 = vunpack.c.0.s8 %v181
  %v183 = vlaneseq
  %v184 = vshrl.u32 %v183, 7
  %v185 = vsub.s32 %v182, %v184
  %v186 = vrot.slane %v178, %v185
  %v188 = vunpack.c.l.s4 1983009808
  %v189 = vunpack.c.0.s8 %v188
  %v190 = vlaneseq
  %v191 = vshrl.u32 %v190, 7
  %v192 = vsub.s32 %v189, %v191
  %v193 = vrot.slane %v179, %v192
  %v194 = vcombine.low %v186, %v193
  %196 = vst [vmem:[%s2] sm:$0xff] %v194
  // Predicated region
  $region10: #{model_forward.1} parent=0 // pred_check
    _
  $region11: #{model_forward.1} parent=0 // pred_check_branch
    %198 = sbr.rel (0) target = $region13
  $region12: #{model_forward.1} parent=0 // pred_region
    _
  $region13: #{model_forward.1} parent=0 // pred_fallthru
    _
  // Predicated region
  $region14: #{model_forward.1} parent=0 // pred_check
    _
  $region15: #{model_forward.1} parent=0 // pred_check_branch
    %200 = sbr.rel (0) target = $region17
  $region16: #{model_forward.1} parent=0 // pred_region
    _
  $region17: #{model_forward.1} parent=0 // pred_fallthru
    _

</llo_original>
